<compile_context>
chip_gen: v7x
topology: tpu7x:2x2x1
jax: 0.10.0
libtpu: 0.0.40
codegen_flags: <defaults>
</compile_context>

<pallas_src>
from functools import partial
from types import SimpleNamespace

import jax
import jax.numpy as jnp
from jax.experimental import pallas as pl
from jax.experimental.pallas import tpu as pltpu


_LANES = 128
_SUBLANES = 8
_TILE = _LANES * _SUBLANES  # 1024


# ---------------------------------------------------------------------------
# getter glue (mirrors state_path_penalty_getter) — host-side Python, no kernel
# ---------------------------------------------------------------------------
def state_path_penalty_getter(x, spec=None):
    o = x
    for path_e in spec.split('.'):
        o = getattr(o, path_e)
    return o


# ---------------------------------------------------------------------------
# Pallas kernels — `scale` is a trace-time Python constant (closure), so the
# multiply is folded by the compiler; no SMEM operand needed.
# ---------------------------------------------------------------------------
def _sum_scale_kernel(pen_ref, out_ref, *, scale):
    # pen_ref: (rows, 128) VMEM, zero-padded, lane+sublane dense
    # out_ref: (1, 1)      VMEM f32 scalar result
    total = jnp.sum(pen_ref[...].astype(jnp.float32))
    out_ref[...] = jnp.full((1, 1), total * scale, dtype=out_ref.dtype)


def _scale_kernel(pen_ref, out_ref, *, scale):
    # elementwise path for reduction='none'; lane-dense in and out
    out_ref[...] = (pen_ref[...].astype(jnp.float32) * scale).astype(out_ref.dtype)


# ---------------------------------------------------------------------------
# jitted wrapper: pad/reshape fuse into the surrounding XLA program; the
# pallas_call is cached by jit (scale & reduction are static).
# ---------------------------------------------------------------------------
@partial(jax.jit, static_argnames=('scale', 'reduction'))
def _penalty_reduce(pen_vec, *, scale, reduction):
    B = pen_vec.shape[0]
    out_dtype = (pen_vec.dtype
                 if jnp.issubdtype(pen_vec.dtype, jnp.floating) else jnp.float32)

    P = ((B + _TILE - 1) // _TILE) * _TILE          # pad to multiple of 8*128
    rows = P // _LANES                               # rows is a multiple of 8
    pen2d = jnp.pad(pen_vec, (0, P - B)).reshape(rows, _LANES)

    if reduction == 'none':
        out = pl.pallas_call(
            partial(_scale_kernel, scale=float(scale)),
            out_shape=jax.ShapeDtypeStruct((rows, _LANES), out_dtype),
            in_specs=[pl.BlockSpec(memory_space=pltpu.VMEM)],
            out_specs=pl.BlockSpec(memory_space=pltpu.VMEM),
        )(pen2d)
        return out.reshape(P)[:B]
    else:  # 'sum' (mean is folded into `scale` by the caller)
        out = pl.pallas_call(
            partial(_sum_scale_kernel, scale=float(scale)),
            out_shape=jax.ShapeDtypeStruct((1, 1), jnp.float32),
            in_specs=[pl.BlockSpec(memory_space=pltpu.VMEM)],
            out_specs=pl.BlockSpec(memory_space=pltpu.VMEM),
        )(pen2d)
        return out.reshape(()).astype(out_dtype)


def _penalty_reduce_jnp(pen_vec, *, scale, reduction):
    # Plain-jnp fast path: fuses into producer/consumer, no custom-call launch.
    if reduction == 'none':
        return pen_vec * scale
    return jnp.sum(pen_vec.astype(jnp.float32)) * scale


# ---------------------------------------------------------------------------
# StatePenalty module (JAX / Pallas version of the Loss subclass)
# ---------------------------------------------------------------------------
class StatePenaltyPallas:
    def __init__(self, getter, weight=1.0, reduction='mean', name='penalty',
                 contrib=1.0, use_pallas=True):
        if isinstance(getter, str):
            getter = partial(state_path_penalty_getter, spec=getter)
        self.getter = getter
        self.weight = float(weight)
        self.reduction = reduction
        self._name = name
        self.contrib = float(contrib)
        self.use_pallas = use_pallas

    def forward(self, probs, predactions, gold, x=None):
        penalty_vec = self.getter(x)
        assert penalty_vec.ndim == 1 and penalty_vec.shape[0] == probs.shape[0]

        B = penalty_vec.shape[0]
        if self.reduction in ('mean', 'default'):
            scale, red = self.weight * self.contrib / B, 'sum'   # mean folded in
        elif self.reduction == 'sum':
            scale, red = self.weight * self.contrib, 'sum'
        elif self.reduction in ('none', None):
            scale, red = self.weight * self.contrib, 'none'
        else:
            raise Exception(f'unknown reduction mode: {self.reduction}')

        reduce_fn = _penalty_reduce if self.use_pallas else _penalty_reduce_jnp
        ret = reduce_fn(penalty_vec, scale=scale, reduction=red)
        return {'loss': ret, self._name: ret}

    __call__ = forward


# ---------------------------------------------------------------------------
# demo / sanity check
# ---------------------------------------------------------------------------
if __name__ == "__main__":
    key = jax.random.PRNGKey(0)
    B, C = 8, 16

    k1, k2, k3 = jax.random.split(key, 3)
    probs = jax.nn.softmax(jax.random.normal(k1, (B, C), dtype=jnp.float32), axis=-1)
    predactions = jnp.argmax(probs, axis=-1)
    gold = jax.random.randint(k2, (B,), 0, C)

    # synthetic "State" object with an attribute path mstate.penalty
    penalty_vec = jax.random.uniform(k3, (B,), dtype=jnp.float32)
    x_state = SimpleNamespace(mstate=SimpleNamespace(penalty=penalty_vec))

    # mean reduction
    loss_mod = StatePenaltyPallas(getter='mstate.penalty', weight=0.5,
                                  reduction='mean', name='penalty', contrib=2.0)
    out = loss_mod(probs, predactions, gold, x=x_state)
    loss = jax.block_until_ready(out['loss'])
    ref = jnp.mean(penalty_vec) * 0.5 * 2.0
    assert jnp.allclose(loss, ref, rtol=1e-6, atol=1e-6), (loss, ref)

    # sum reduction
    loss_sum = StatePenaltyPallas(getter='mstate.penalty', weight=0.5,
                                  reduction='sum', contrib=2.0)
    out_sum = jax.block_until_ready(loss_sum(probs, predactions, gold, x=x_state)['loss'])
    assert jnp.allclose(out_sum, jnp.sum(penalty_vec) * 0.5 * 2.0, rtol=1e-6, atol=1e-6)

    # 'none' reduction (per-example)
    loss_none = StatePenaltyPallas(getter='mstate.penalty', weight=0.5,
                                   reduction='none', contrib=2.0)
    out_none = jax.block_until_ready(loss_none(probs, predactions, gold, x=x_state)['loss'])
    assert out_none.shape == (B,)
    assert jnp.allclose(out_none, penalty_vec * 0.5 * 2.0, rtol=1e-6, atol=1e-6)

    print("KERNEL_OK")
</pallas_src>

<mosaic_0001>
module attributes {stable_mosaic.version = 11 : i64} {
  func.func @_sum_scale_kernel(%arg0: memref<8x128xf32, #tpu.memory_space<vmem>>, %arg1: memref<1x1xf32, #tpu.memory_space<vmem>>) attributes {dimension_semantics = [], scalar_prefetch = 0 : i64, scratch_operands = 0 : i64, tpu.core_type = #tpu.core_type<tc>} {
    %c0 = arith.constant 0 : index
    %c0_0 = arith.constant 0 : index
    %0 = vector.load %arg0[%c0, %c0_0] : memref<8x128xf32, #tpu.memory_space<vmem>>, vector<8x128xf32>
    %1 = vector.shape_cast %0 : vector<8x128xf32> to vector<1x8x128xf32>
    %cst = arith.constant dense<0.000000e+00> : vector<1xf32>
    %2 = vector.multi_reduction <add>, %1, %cst [1, 2] : vector<1x8x128xf32> to vector<1xf32>
    %3 = vector.shape_cast %2 : vector<1xf32> to vector<1x1x1xf32>
    %4 = vector.extract %3[0, 0, 0] : f32 from vector<1x1x1xf32>
    %cst_1 = arith.constant 1.250000e-01 : f32
    %5 = arith.mulf %4, %cst_1 : f32
    %6 = vector.broadcast %5 : f32 to vector<1x1xf32>
    %c0_2 = arith.constant 0 : index
    %c0_3 = arith.constant 0 : index
    %7 = vector.load %arg1[%c0_2, %c0_3] : memref<1x1xf32, #tpu.memory_space<vmem>>, vector<1x1xf32>
    tpu.vector_store %arg1[%c0_2, %c0_3], %6 {strides = array<i32>} : memref<1x1xf32, #tpu.memory_space<vmem>>, vector<1x1xf32>,
    return
  }
}

</mosaic_0001>

<llo_original>
// kernel: _penalty_reduce.1
$region0: #{_penalty_reduce.1}
  #allocation0 [shape = 'u32[]', space=smem, size = 0x4, offset = 0x4, fixed_abs, tag = 'smem constant byte address 0x4 - core index']
  #allocation1 [shape = 'u32[144,128]{1,0:T(1,128)}', space=vmem, size = 0x12000, scoped, tag = 'internal scratch']
  %s0 = inlined_call_operand.vmem [shape: f32[8,128], index: 0, kind: input, shape index: {}]
  %s1 = inlined_call_operand.hbm [shape: f32[1,1], index: 1, kind: output, shape index: {}]
  %s2 = sld [smem:[#allocation0]]
  $region14: #{_penalty_reduce.1} parent=0
    _
  %s4 = ssub.s32 1, %s2
  %s5 = scalar_select 0, %s4, %s2
  $region1: #{_penalty_reduce.1} parent=0
    #allocation2 [shape = 'u8[512]{0}', space=vmem, size = 0x400, scoped, tag = 'output window, operand 0, single buffered']
    #allocation3 [shape = 's32[1]{0}', space=sflag, size = 0x4, scoped, tag = 'scoped memory for _penalty_reduce.1']
    %6 = vsyncpa [#allocation3], 0
    // Predicated region
    $region2: #{_penalty_reduce.1} parent=1 // pred_check
      _
    $region3: #{_penalty_reduce.1} parent=1 // pred_check_branch
      %8 = sbr.rel (0) target = $region5
    $region4: #{_penalty_reduce.1} parent=1 // pred_region
      _
    $region5: #{_penalty_reduce.1} parent=1 // pred_fallthru
      _
    %v9 = vld [vmem:[%s0] sm:$0xff]
    %10 = vadd.xlane.f32.xlu0 %v9
    %v11 = vpop.xlane.xlu0 %10
    %v12 = vrot.slane %v11, 4
    %v13 = vadd.f32 %v11, %v12
    %v14 = vrot.slane %v13, 2
    %v15 = vadd.f32 %v13, %v14
    %v16 = vrot.slane %v15, 1
    %v17 = vadd.f32 %v15, %v16
    %s18 = vtos %v17
    %s19 = smul.f32 %s18, 0.125
    %v20 = vstv %s19
    %vm21 = vcmask 0
    %22 = vst.msk [vmem:[#allocation2] sm:$0x1] %vm21, %v20
    // Predicated region
    $region6: #{_penalty_reduce.1} parent=1 // pred_check
      _
    $region7: #{_penalty_reduce.1} parent=1 // pred_check_branch
      %24 = sbr.rel (0) target = $region9
    $region8: #{_penalty_reduce.1} parent=1 // pred_region
      %s26 = ssub.s32 16, 16
      %27 = vsyncadd [#allocation3], %s26
      %s29 = sshll.u32 [#allocation2], 4
      %s30 = int_to_ptr.vmem [resolvable:$true] %s29
      %32 = dma.vmem_to_hbm [thread:$0]  %s30, 16, %s1, [#allocation3]
    $region9: #{_penalty_reduce.1} parent=1 // pred_fallthru
      _
    // Predicated region
    $region10: #{_penalty_reduce.1} parent=1 // pred_check
      _
    $region11: #{_penalty_reduce.1} parent=1 // pred_check_branch
      %34 = sbr.rel (0) target = $region13
    $region12: #{_penalty_reduce.1} parent=1 // pred_region
      %35 = dma.done [#allocation3], 16
    $region13: #{_penalty_reduce.1} parent=1 // pred_fallthru
      _
    %36 = vsyncpa [#allocation3], 1

</llo_original>
